<compile_context>
chip_gen: v7x
topology: tpu7x:2x2x1
jax: 0.10.0
libtpu: 0.0.40
codegen_flags: <defaults>
</compile_context>

<pallas_src>
import jax
import jax.numpy as jnp
from jax.experimental import pallas as pl
from jax.experimental.pallas import tpu as pltpu


def _round_up(x, m):
    return ((x + m - 1) // m) * m


def _cdiv(a, b):
    return -(-a // b)


def _balanced_tile(dim, align, cap):
    """Tile that is a multiple of `align`, <= max(cap, align), with minimal padding.

    Returns (tile, padded_dim, n_blocks) with padded_dim == tile * n_blocks.
    """
    d = _round_up(dim, align)
    cap = max(cap, align)
    if d <= cap:
        return d, d, 1
    n = _cdiv(d, cap)
    tile = _round_up(_cdiv(d, n), align)
    return tile, tile * n, n


def _tpu_vmem_capacity_bytes():
    """Physical VMEM per TensorCore; conservative default if the query fails."""
    try:
        return int(pltpu.get_tpu_info().vmem_capacity_bytes)
    except Exception:
        return 64 << 20  # treat unknown hardware like v7x (smallest VMEM)


# ---------------------------------------------------------------------------
# Kernels
# ---------------------------------------------------------------------------

def _matmul_kernel_single_k(x_ref, w_ref, o_ref):
    # Entire K reduction in one block (also used by the grid-less fast path).
    o_ref[...] = jnp.dot(
        x_ref[...], w_ref[...], preferred_element_type=jnp.float32
    ).astype(o_ref.dtype)


def _matmul_kernel_multi_k_inplace(x_ref, w_ref, o_ref):
    # f32 output: accumulate directly into the VMEM-resident output block.
    # Grid: (M//tm, N//tn, K//tk); reduction axis (K) is last / "arbitrary".
    @pl.when(pl.program_id(2) == 0)
    def _():
        o_ref[...] = jnp.zeros_like(o_ref)

    o_ref[...] += jnp.dot(
        x_ref[...], w_ref[...], preferred_element_type=jnp.float32
    )


def _matmul_kernel_multi_k_scratch(x_ref, w_ref, o_ref, acc_ref):
    # Fallback for non-f32 outputs (e.g. bf16 output): keep an f32 accumulator.
    @pl.when(pl.program_id(2) == 0)
    def _():
        acc_ref[...] = jnp.zeros_like(acc_ref)

    acc_ref[...] += jnp.dot(
        x_ref[...], w_ref[...], preferred_element_type=jnp.float32
    )

    @pl.when(pl.program_id(2) == pl.num_programs(2) - 1)
    def _():
        o_ref[...] = acc_ref[...].astype(o_ref.dtype)


# ---------------------------------------------------------------------------
# Wrapper
# ---------------------------------------------------------------------------

def electrical_synaptic_transmission(x, synaptic_weights, *, tm=None, tn=None,
                                     tk=None, use_bf16=False):
    """Pallas equivalent of ElectricalSynapticTransmission.forward(x)."""
    M, K = x.shape
    K2, N = synaptic_weights.shape
    assert K == K2, "input_size mismatch between x and synaptic_weights"

    out_dtype = x.dtype
    if use_bf16:
        # TODO(synk): bf16 inputs deviate slightly from the PyTorch f32 numerics.
        x = x.astype(jnp.bfloat16)
        synaptic_weights = synaptic_weights.astype(jnp.bfloat16)

    in_item = jnp.dtype(x.dtype).itemsize
    out_item = jnp.dtype(out_dtype).itemsize
    cost = pl.CostEstimate(
        flops=2 * M * N * K,
        transcendentals=0,
        bytes_accessed=(M * K + K * N) * in_item + M * N * out_item,
    )

    # ---- Fast path: whole problem fits in VMEM -> one grid-less call, no pad.
    total_bytes = (M * K + K * N + M * N) * 4
    if tm is None and tn is None and tk is None and total_bytes <= (4 << 20):
        return pl.pallas_call(
            _matmul_kernel_single_k,
            out_shape=jax.ShapeDtypeStruct((M, N), out_dtype),
            cost_estimate=cost,
        )(x, synaptic_weights)

    # ---- Generation-gated tile caps & explicit scoped-VMEM limit.
    vmem_cap = _tpu_vmem_capacity_bytes()
    big_vmem = vmem_cap >= (100 << 20)      # v5e / v6e: 128 MiB per TensorCore
    if big_vmem:
        cap_m, cap_n, cap_k = 512, 1024, 2048
        vmem_limit = 64 << 20               # working set <= ~28 MiB double-buffered
    else:                                    # v7x (64 MiB per TC) or unknown
        cap_m, cap_n, cap_k = 512, 512, 2048
        vmem_limit = 32 << 20               # working set <= ~18 MiB double-buffered

    # ---- Balanced, divisor-aware tile selection (minimal padding).
    auto_n = tn is None
    if tm is None:
        tm, Mp, mg = _balanced_tile(M, 8, cap_m)
    else:
        tm = _round_up(int(tm), 8)
        Mp = _round_up(M, tm)
        mg = Mp // tm
    if tn is None:
        tn, Np, ng = _balanced_tile(N, 128, cap_n)
    else:
        tn = _round_up(int(tn), 128)
        Np = _round_up(N, tn)
        ng = Np // tn
    if tk is None:
        tk, Kp, kg = _balanced_tile(K, 128, cap_k)
    else:
        tk = _round_up(int(tk), 128)
        Kp = _round_up(K, tk)
        kg = Kp // tk

    # ---- v7x dual-TensorCore hint: make sure a "parallel" axis has >= 2 steps.
    if (not big_vmem) and auto_n and mg == 1 and ng == 1 and Np >= 256:
        half = 128 * max(1, (Np // 128) // 2)
        if Np % half == 0:
            tn, ng = half, Np // half
        else:
            tn, ng = 128, Np // 128

    # ---- Pad only when a remainder actually exists (zero K rows/cols are exact).
    xp = x if (Mp == M and Kp == K) else jnp.pad(x, ((0, Mp - M), (0, Kp - K)))
    wp = (
        synaptic_weights
        if (Kp == K and Np == N)
        else jnp.pad(synaptic_weights, ((0, Kp - K), (0, Np - N)))
    )

    compiler_params_2d = pltpu.CompilerParams(
        dimension_semantics=("parallel", "parallel"),
        vmem_limit_bytes=vmem_limit,
    )
    compiler_params_3d = pltpu.CompilerParams(
        dimension_semantics=("parallel", "parallel", "arbitrary"),
        vmem_limit_bytes=vmem_limit,
    )

    if kg == 1:
        # Single K step: whole reduction per tile, no accumulator needed.
        out = pl.pallas_call(
            _matmul_kernel_single_k,
            out_shape=jax.ShapeDtypeStruct((Mp, Np), out_dtype),
            grid_spec=pltpu.PrefetchScalarGridSpec(
                num_scalar_prefetch=0,
                grid=(mg, ng),
                in_specs=[
                    pl.BlockSpec((tm, Kp), lambda i, j: (i, 0)),
                    pl.BlockSpec((Kp, tn), lambda i, j: (0, j)),
                ],
                out_specs=pl.BlockSpec((tm, tn), lambda i, j: (i, j)),
            ),
            compiler_params=compiler_params_2d,
            cost_estimate=cost,
        )(xp, wp)
    elif jnp.dtype(out_dtype) == jnp.float32:
        # Multi-K, f32 output: accumulate straight into o_ref (no scratch).
        out = pl.pallas_call(
            _matmul_kernel_multi_k_inplace,
            out_shape=jax.ShapeDtypeStruct((Mp, Np), out_dtype),
            grid_spec=pltpu.PrefetchScalarGridSpec(
                num_scalar_prefetch=0,
                grid=(mg, ng, kg),
                in_specs=[
                    pl.BlockSpec((tm, tk), lambda i, j, k: (i, k)),
                    pl.BlockSpec((tk, tn), lambda i, j, k: (k, j)),
                ],
                out_specs=pl.BlockSpec((tm, tn), lambda i, j, k: (i, j)),
            ),
            compiler_params=compiler_params_3d,
            cost_estimate=cost,
        )(xp, wp)
    else:
        # Multi-K, non-f32 output: keep an f32 VMEM accumulator.
        out = pl.pallas_call(
            _matmul_kernel_multi_k_scratch,
            out_shape=jax.ShapeDtypeStruct((Mp, Np), out_dtype),
            grid_spec=pltpu.PrefetchScalarGridSpec(
                num_scalar_prefetch=0,
                grid=(mg, ng, kg),
                in_specs=[
                    pl.BlockSpec((tm, tk), lambda i, j, k: (i, k)),
                    pl.BlockSpec((tk, tn), lambda i, j, k: (k, j)),
                ],
                out_specs=pl.BlockSpec((tm, tn), lambda i, j, k: (i, j)),
                scratch_shapes=[pltpu.VMEM((tm, tn), jnp.float32)],
            ),
            compiler_params=compiler_params_3d,
            cost_estimate=cost,
        )(xp, wp)

    if Mp != M or Np != N:
        out = out[:M, :N]
    return out


if __name__ == "__main__":
    key = jax.random.PRNGKey(0)
    k_x, k_w, k_x2, k_w2, k_x3, k_w3 = jax.random.split(key, 6)

    # --- Small shapes consistent with the module: batch=8, in=32, out=64 ----
    # (hits the grid-less fast path: no padding, no slicing, one call)
    batch, input_size, output_size = 8, 32, 64
    x = jax.random.normal(k_x, (batch, input_size), dtype=jnp.float32)
    synaptic_weights = jax.random.normal(
        k_w, (input_size, output_size), dtype=jnp.float32
    )
    out = jax.block_until_ready(electrical_synaptic_transmission(x, synaptic_weights))
    ref = x @ synaptic_weights
    assert out.shape == (batch, output_size)
    assert jnp.allclose(out, ref, atol=1e-5, rtol=1e-5), "mismatch (fast path)"

    # --- Moderate shape exercising the tiled multi-K in-place-accumulate path
    M2, K2_, N2 = 64, 2304, 192  # balanced tiles -> zero K padding
    x2 = jax.random.normal(k_x2, (M2, K2_), dtype=jnp.float32)
    w2 = jax.random.normal(k_w2, (K2_, N2), dtype=jnp.float32)
    out2 = jax.block_until_ready(electrical_synaptic_transmission(x2, w2))
    ref2 = x2 @ w2
    assert out2.shape == (M2, N2)
    assert jnp.allclose(out2, ref2, atol=2e-3, rtol=2e-3), "mismatch (multi-K)"

    # --- Forced tiny tiles + unaligned dims: exercises padding/slice fallback
    M3, K3, N3 = 16, 200, 384
    x3 = jax.random.normal(k_x3, (M3, K3), dtype=jnp.float32)
    w3 = jax.random.normal(k_w3, (K3, N3), dtype=jnp.float32)
    out3 = jax.block_until_ready(
        electrical_synaptic_transmission(x3, w3, tm=8, tn=128, tk=128)
    )
    ref3 = x3 @ w3
    assert out3.shape == (M3, N3)
    assert jnp.allclose(out3, ref3, atol=2e-3, rtol=2e-3), "mismatch (padded tiled)"

    print("KERNEL_OK")
</pallas_src>

<mosaic_0001>
module attributes {stable_mosaic.version = 11 : i64} {
  func.func @_matmul_kernel_single_k(%arg0: memref<8x32xf32, #tpu.memory_space<vmem>>, %arg1: memref<32x64xf32, #tpu.memory_space<vmem>>, %arg2: memref<8x64xf32, #tpu.memory_space<vmem>>) attributes {dimension_semantics = [], scalar_prefetch = 0 : i64, scratch_operands = 0 : i64, tpu.core_type = #tpu.core_type<tc>} {
    %c0 = arith.constant 0 : index
    %c0_0 = arith.constant 0 : index
    %0 = vector.load %arg0[%c0, %c0_0] : memref<8x32xf32, #tpu.memory_space<vmem>>, vector<8x32xf32>
    %c0_1 = arith.constant 0 : index
    %c0_2 = arith.constant 0 : index
    %1 = vector.load %arg1[%c0_1, %c0_2] : memref<32x64xf32, #tpu.memory_space<vmem>>, vector<32x64xf32>
    %cst = arith.constant dense<0.000000e+00> : vector<8x64xf32>
    %2 = tpu.matmul %0, %1, %cst {dimension_numbers = #tpu.dot_dimension_numbers<[1], [0], [0], [1], [0, 0, 1, 1], [], []>} : vector<8x32xf32>, vector<32x64xf32>, vector<8x64xf32> -> vector<8x64xf32>
    %c0_3 = arith.constant 0 : index
    %c0_4 = arith.constant 0 : index
    %3 = vector.load %arg2[%c0_3, %c0_4] : memref<8x64xf32, #tpu.memory_space<vmem>>, vector<8x64xf32>
    tpu.vector_store %arg2[%c0_3, %c0_4], %2 {strides = array<i32>} : memref<8x64xf32, #tpu.memory_space<vmem>>, vector<8x64xf32>,
    return
  }
}

</mosaic_0001>

<llo_original>
// kernel: tpu_custom_call.1
$region0: #{tpu_custom_call.1}
  #allocation0 [shape = 'u32[]', space=smem, size = 0x4, offset = 0x4, fixed_abs, tag = 'smem constant byte address 0x4 - core index']
  #allocation1 [shape = 'u32[144,128]{1,0:T(1,128)}', space=vmem, size = 0x12000, scoped, tag = 'internal scratch']
  %s0 = inlined_call_operand.hbm [shape: f32[8,32], index: 0, kind: input, shape index: {}]
  %s1 = inlined_call_operand.hbm [shape: f32[32,64], index: 1, kind: input, shape index: {}]
  %s2 = inlined_call_operand.hbm [shape: f32[8,64], index: 2, kind: output, shape index: {}]
  %s3 = sld [smem:[#allocation0]]
  $region26: #{tpu_custom_call.1} parent=0
    _
  %s5 = ssub.s32 1, %s3
  %s6 = scalar_select 0, %s5, %s3
  $region1: #{tpu_custom_call.1} parent=0
    #allocation2 [shape = 'u8[4096]{0}', space=vmem, size = 0x1000, scoped, tag = 'input window, operand 0, single buffered']
    #allocation3 [shape = 's32[1]{0}', space=sflag, size = 0x4, scoped, tag = 'scoped memory for tpu_custom_call.1']
    #allocation4 [shape = 's32[1]{0}', space=sflag, size = 0x4, scoped, tag = 'scoped memory for tpu_custom_call.1']
    #allocation5 [shape = 'u8[16384]{0}', space=vmem, size = 0x4000, scoped, tag = 'input window, operand 1, single buffered']
    #allocation6 [shape = 's32[1]{0}', space=sflag, size = 0x4, scoped, tag = 'scoped memory for tpu_custom_call.1']
    #allocation7 [shape = 'u8[4096]{0}', space=vmem, size = 0x1000, scoped, tag = 'output window, operand 0, single buffered']
    %7 = vsyncpa [#allocation3], 0
    %8 = vsyncpa [#allocation6], 0
    %9 = vsyncpa [#allocation4], 0
    // Predicated region
    $region2: #{tpu_custom_call.1} parent=1 // pred_check
      _
    $region3: #{tpu_custom_call.1} parent=1 // pred_check_branch
      %11 = sbr.rel (0) target = $region5
    $region4: #{tpu_custom_call.1} parent=1 // pred_region
      %s13 = ssub.s32 128, 128
      %14 = vsyncadd [#allocation3], %s13
      %s16 = sshll.u32 [#allocation2], 4
      %s17 = int_to_ptr.vmem [resolvable:$true] %s16
      %19 = dma.hbm_to_vmem [thread:$0]  %s0, 128, %s17, [#allocation3]
    $region5: #{tpu_custom_call.1} parent=1 // pred_fallthru
      _
    // Predicated region
    $region6: #{tpu_custom_call.1} parent=1 // pred_check
      _
    $region7: #{tpu_custom_call.1} parent=1 // pred_check_branch
      %21 = sbr.rel (0) target = $region9
    $region8: #{tpu_custom_call.1} parent=1 // pred_region
      %s23 = ssub.s32 512, 512
      %24 = vsyncadd [#allocation6], %s23
      %s25 = sshll.u32 [#allocation5], 4
      %s26 = int_to_ptr.vmem [resolvable:$true] %s25
      %31 = dma.hbm_to_vmem [thread:$0]  %s1, 512, %s26, [#allocation6], 128, 128, 8
    $region9: #{tpu_custom_call.1} parent=1 // pred_fallthru
      _
    // Predicated region
    $region10: #{tpu_custom_call.1} parent=1 // pred_check
      _
    $region11: #{tpu_custom_call.1} parent=1 // pred_check_branch
      %33 = sbr.rel (0) target = $region13
    $region12: #{tpu_custom_call.1} parent=1 // pred_region
      %34 = dma.done [#allocation3], 128
    $region13: #{tpu_custom_call.1} parent=1 // pred_fallthru
      _
    // Predicated region
    $region14: #{tpu_custom_call.1} parent=1 // pred_check
      _
    $region15: #{tpu_custom_call.1} parent=1 // pred_check_branch
      %36 = sbr.rel (0) target = $region17
    $region16: #{tpu_custom_call.1} parent=1 // pred_region
      %37 = dma.done [#allocation6], 512
    $region17: #{tpu_custom_call.1} parent=1 // pred_fallthru
      _
    %v38 = vld [vmem:[#allocation2] sm:$0xff]
    %v39 = vld [vmem:[#allocation5] sm:$0xff]
    %v40 = vld [vmem:[#allocation5 + $0x8] sm:$0xff]
    %v41 = vld [vmem:[#allocation5 + $0x10] sm:$0xff]
    %v42 = vld [vmem:[#allocation5 + $0x18] sm:$0xff]
    %vm43 = vcmask 261120
    %v45 = vsel %vm43, %v38, 0
    %47 = vmatprep.subr.mxu0 0.0
    %48 = vmatpush1.msra.mxu0 %v39
    %49 = vmatprep.subr.mxu0 0.0
    %50 = vmatpush1.msra.mxu0 %v40
    %51 = vmatprep.subr.mxu0 0.0
    %52 = vmatpush1.msra.mxu0 %v41
    %53 = vmatprep.subr.mxu0 0.0
    %54 = vmatpush1.msra.mxu0 %v42
    %55 = vmatprep.subr.mxu0 0.0
    %56 = vmatpush1.msra.mxu0 0.0
    %57 = vmatprep.subr.mxu0 0.0
    %58 = vmatpush1.msra.mxu0 0.0
    %59 = vmatprep.subr.mxu0 0.0
    %60 = vmatpush1.msra.mxu0 0.0
    %61 = vmatprep.subr.mxu0 0.0
    %62 = vmatpush1.msra.mxu0 0.0
    %63 = vmatprep.subr.mxu0 0.0
    %64 = vmatpush1.msra.mxu0 0.0
    %65 = vmatprep.subr.mxu0 0.0
    %66 = vmatpush1.msra.mxu0 0.0
    %67 = vmatprep.subr.mxu0 0.0
    %68 = vmatpush1.msra.mxu0 0.0
    %69 = vmatprep.subr.mxu0 0.0
    %70 = vmatpush1.msra.mxu0 0.0
    %71 = vmatprep.subr.mxu0 0.0
    %72 = vmatpush1.msra.mxu0 0.0
    %73 = vmatprep.subr.mxu0 0.0
    %74 = vmatpush1.msra.mxu0 0.0
    %75 = vmatprep.subr.mxu0 0.0
    %76 = vmatpush1.msra.mxu0 0.0
    %77 = vmatprep.subr.mxu0 0.0
    %78 = vmatpush1.msra.mxu0 0.0
    %79 = vmatprep.subr.mxu0 0.0
    %80 = vmatpush1.msra.mxu0 0.0
    %81 = vmatprep.subr.mxu0 0.0
    %82 = vmatpush1.msra.mxu0 0.0
    %83 = vmatprep.subr.mxu0 0.0
    %84 = vmatpush1.msra.mxu0 0.0
    %85 = vmatprep.subr.mxu0 0.0
    %86 = vmatpush1.msra.mxu0 0.0
    %87 = vmatprep.subr.mxu0 0.0
    %88 = vmatpush1.msra.mxu0 0.0
    %89 = vmatprep.subr.mxu0 0.0
    %90 = vmatpush1.msra.mxu0 0.0
    %91 = vmatprep.subr.mxu0 0.0
    %92 = vmatpush1.msra.mxu0 0.0
    %93 = vmatprep.subr.mxu0 0.0
    %94 = vmatpush1.msra.mxu0 0.0
    %95 = vmatprep.subr.mxu0 0.0
    %96 = vmatpush1.msra.mxu0 0.0
    %97 = vmatprep.subr.mxu0 0.0
    %98 = vmatpush1.msra.mxu0 0.0
    %99 = vmatprep.subr.mxu0 0.0
    %100 = vmatpush1.msra.mxu0 0.0
    %101 = vmatprep.subr.mxu0 0.0
    %102 = vmatpush1.msra.mxu0 0.0
    %103 = vmatprep.subr.mxu0 0.0
    %104 = vmatpush1.msra.mxu0 0.0
    %105 = vmatprep.subr.mxu0 0.0
    %106 = vmatpush1.msra.mxu0 0.0
    %107 = vmatprep.subr.mxu0 0.0
    %108 = vmatpush1.msra.mxu0 0.0
    %109 = vmatprep.subr.mxu0 0.0
    %110 = vmatpush1.msra.mxu0 0.0
    %111 = vmatprep.mubr.f32.mxu0 0.0
    %112 = vmatmul.mubr.f32.gmra.mrb[0].mxu0 %v45
    %v113 = vpop.f32.mrb[0].mxu0
    %v114 = vadd.f32 0.0, %v113
    %v115 = vpop.f32.mrb[0].mxu0
    %116 = vdwg.mxu0
    %vm117 = vcmask 523264
    %118 = vst.msk [vmem:[#allocation7] sm:$0xff] %vm117, %v114
    // Predicated region
    $region18: #{tpu_custom_call.1} parent=1 // pred_check
      _
    $region19: #{tpu_custom_call.1} parent=1 // pred_check_branch
      %120 = sbr.rel (0) target = $region21
    $region20: #{tpu_custom_call.1} parent=1 // pred_region
      %s122 = ssub.s32 128, 128
      %123 = vsyncadd [#allocation4], %s122
      %s125 = sshll.u32 [#allocation7], 4
      %s126 = int_to_ptr.vmem [resolvable:$true] %s125
      %128 = dma.vmem_to_hbm [thread:$0]  %s126, 128, %s2, [#allocation4]
    $region21: #{tpu_custom_call.1} parent=1 // pred_fallthru
      _
    // Predicated region
    $region22: #{tpu_custom_call.1} parent=1 // pred_check
      _
    $region23: #{tpu_custom_call.1} parent=1 // pred_check_branch
      %130 = sbr.rel (0) target = $region25
    $region24: #{tpu_custom_call.1} parent=1 // pred_region
      %131 = dma.done [#allocation4], 128
    $region25: #{tpu_custom_call.1} parent=1 // pred_fallthru
      _
    %132 = vsyncpa [#allocation3], 1
    %133 = vsyncpa [#allocation6], 1
    %134 = vsyncpa [#allocation4], 1

</llo_original>
